<compile_context>
chip_gen: v7x
topology: tpu7x:2x2x1
jax: 0.10.0
libtpu: 0.0.40
codegen_flags: <defaults>
</compile_context>

<pallas_src>
import functools

import jax
import jax.numpy as jnp
import numpy as np
from jax.experimental import pallas as pl
from jax.experimental.pallas import tpu as pltpu


def _round_up(x, m):
    return ((x + m - 1) // m) * m


def _sublane_tile(dtype):
    return {4: 8, 2: 16, 1: 32}.get(jnp.dtype(dtype).itemsize, 8)


def _tile_bytes(shape, dtype):
    """VMEM bytes of a block after Mosaic (sublane, lane) layout padding."""
    dims = [int(d) for d in shape]
    dims[-1] = _round_up(dims[-1], 128)
    if len(dims) >= 2:
        dims[-2] = _round_up(dims[-2], _sublane_tile(dtype))
    n = 1
    for d in dims:
        n *= d
    return n * jnp.dtype(dtype).itemsize


def _vmem_ceiling_bytes():
    """Generation-aware scoped-VMEM ceiling, leaving headroom for Mosaic scratch."""
    cap = 128 * 2 ** 20
    try:
        cap = int(pltpu.get_tpu_info().vmem_capacity_bytes)
    except Exception:
        pass
    # ~102 MiB on 128 MiB parts (v5e/v6e), ~51 MiB on 64 MiB parts (v7x).
    return int(cap * 0.8)


def _conv_bn_relu_kernel(x_ref, w_ref, shift_ref, o_ref, patch_ref, *,
                         taps, n_per_step, c_in, relu):
    # x_ref:     (Nb, C_in, L)         flat padded images (bf16); lane = flat H*W
    # w_ref:     (C_out, KH*KW*C_in)   BN-folded weight, rows ordered (kh, kw, c)
    # shift_ref: (C_out, 1)            folded BN shift (or conv bias), f32
    # o_ref:     (Nb, C_out, M_out)    M_out = H_out*W_pad flat output rows
    # patch_ref: (KH*KW*C_in, M_out)   VMEM im2col scratch (bf16)
    m_out = o_ref.shape[-1]
    w = w_ref[...]
    shift = shift_ref[...]
    for n in range(n_per_step):
        # Gather the taps once: each tap is a stride-1 lane window of the flat
        # image; rows [t*C_in, (t+1)*C_in) of the slab hold tap t.
        for t, off in enumerate(taps):
            patch_ref[pl.ds(t * c_in, c_in), :] = x_ref[n, :, pl.ds(off, m_out)]
        # Single fused-contraction MXU matmul, K = KH*KW*C_in, f32 accumulate.
        y = jnp.dot(w, patch_ref[...], preferred_element_type=jnp.float32)
        y = y + shift
        if relu:
            y = jnp.maximum(y, 0.0)
        o_ref[n] = y.astype(o_ref.dtype)


def _conv1_bn_relu_flat(x_pad, w_f, shift, *, dilation, relu,
                        compute_dtype, out_dtype):
    """Stride-1 groups=1 NCHW conv (+shift, +ReLU) on an already padded input.

    Returns (N, C_out, H_out_flat, W_pad); caller crops rows/cols to the true
    output size.
    """
    N, C_in, H_pad, W_pad = x_pad.shape
    C_out, C_in_w, KH, KW = w_f.shape
    assert C_in_w == C_in
    H_out = H_pad - dilation * (KH - 1)
    W_out = W_pad - dilation * (KW - 1)
    M_out = H_out * W_pad          # full-width rows; garbage cols sliced later
    KKC = KH * KW * C_in
    taps = tuple(kh * dilation * W_pad + kw * dilation
                 for kh in range(KH) for kw in range(KW))
    tail = (KW - 1) * dilation     # last-row read overrun -> zero tail
    L = H_pad * W_pad + tail

    x_flat = x_pad.reshape(N, C_in, H_pad * W_pad).astype(compute_dtype)
    if tail:
        x_flat = jnp.pad(x_flat, ((0, 0), (0, 0), (0, tail)))
    # Weight rows ordered (kh, kw, c) to match the in-kernel patch build.
    w2 = jnp.transpose(w_f, (0, 2, 3, 1)).reshape(C_out, KKC).astype(compute_dtype)
    shift2 = shift.reshape(C_out, 1).astype(jnp.float32)

    # --- VMEM budget with padded-layout byte counts -------------------------
    ceiling = _vmem_ceiling_bytes()

    def step_bytes(nb):
        return (2 * nb * _tile_bytes((C_in, L), compute_dtype)      # input, dbl-buffered
                + 2 * nb * _tile_bytes((C_out, M_out), out_dtype)   # output, dbl-buffered
                + _tile_bytes((C_out, KKC), compute_dtype)          # grid-invariant weight
                + _tile_bytes((C_out, 1), jnp.float32)              # grid-invariant shift
                + _tile_bytes((KKC, M_out), compute_dtype)          # im2col scratch
                + 2 * _tile_bytes((C_out, M_out), jnp.float32))     # f32 result temporaries

    # Pack several small images per grid step (amortizes per-step overhead).
    nb = 1
    for cand in range(min(N, 8), 0, -1):
        if N % cand == 0 and step_bytes(cand) <= ceiling // 3:
            nb = cand
            break
    vmem_limit = int(min(ceiling, max(32 * 2 ** 20, 2 * step_bytes(nb))))

    kernel = functools.partial(_conv_bn_relu_kernel, taps=taps,
                               n_per_step=nb, c_in=C_in, relu=relu)

    out = pl.pallas_call(
        kernel,
        out_shape=jax.ShapeDtypeStruct((N, C_out, M_out), out_dtype),
        grid_spec=pltpu.PrefetchScalarGridSpec(
            num_scalar_prefetch=0,
            grid=(N // nb,),
            in_specs=[
                pl.BlockSpec((nb, C_in, L), lambda n: (n, 0, 0)),
                pl.BlockSpec((C_out, KKC), lambda n: (0, 0)),
                pl.BlockSpec((C_out, 1), lambda n: (0, 0)),
            ],
            out_specs=pl.BlockSpec((nb, C_out, M_out), lambda n: (n, 0, 0)),
            scratch_shapes=[pltpu.VMEM((KKC, M_out), compute_dtype)],
        ),
        compiler_params=pltpu.CompilerParams(
            dimension_semantics=("parallel",),
            vmem_limit_bytes=vmem_limit),
    )(x_flat, w2, shift2)

    return out.reshape(N, C_out, H_out, W_pad)


def _space_to_depth(x, s):
    """(N, C, H, W) -> (N, s*s*C, ceil(H/s), ceil(W/s)); channels ordered (dy, dx, c)."""
    N, C, H, W = x.shape
    H2, W2 = _round_up(H, s), _round_up(W, s)
    x = jnp.pad(x, ((0, 0), (0, 0), (0, H2 - H), (0, W2 - W)))
    x = x.reshape(N, C, H2 // s, s, W2 // s, s)
    x = jnp.transpose(x, (0, 3, 5, 1, 2, 4))
    return x.reshape(N, s * s * C, H2 // s, W2 // s)


def _weight_space_to_depth(w, s):
    """(C_out, C_in, KH, KW) -> (C_out, s*s*C_in, ceil(KH/s), ceil(KW/s)), zero-filled."""
    C_out, C_in, KH, KW = w.shape
    KH2, KW2 = -(-KH // s), -(-KW // s)
    w = jnp.pad(w, ((0, 0), (0, 0), (0, KH2 * s - KH), (0, KW2 * s - KW)))
    w = w.reshape(C_out, C_in, KH2, s, KW2, s)
    w = jnp.transpose(w, (0, 3, 5, 1, 2, 4))
    return w.reshape(C_out, s * s * C_in, KH2, KW2)


def basic_conv_forward(x, weight, gamma=None, beta=None, running_mean=None,
                       running_var=None, bias=None, *, stride=1, padding=0,
                       dilation=1, groups=1, eps=1e-5, relu=True, bn=True,
                       compute_dtype=jnp.bfloat16, out_dtype=None):
    """BasicConv forward (Conv2d -> eval-mode BatchNorm2d -> ReLU), NCHW in/out."""
    # TODO(synk): groups > 1 and training-mode BN running-stat updates are not
    # implemented.
    assert groups == 1, "only groups=1 is supported"
    N, C_in, H, W = x.shape
    C_out, C_in_w, KH, KW = weight.shape
    assert C_in_w == C_in
    out_dtype = x.dtype if out_dtype is None else out_dtype

    if bn:
        scale = gamma / jnp.sqrt(running_var + eps)
        shift = beta - running_mean * scale
        w_f = weight * scale[:, None, None, None]
    else:
        w_f = weight
        shift = bias if bias is not None else jnp.zeros((C_out,), weight.dtype)

    # True output spatial size of the original (possibly strided/dilated) conv.
    H_out = (H + 2 * padding - dilation * (KH - 1) - 1) // stride + 1
    W_out = (W + 2 * padding - dilation * (KW - 1) - 1) // stride + 1

    x_p = jnp.pad(x, ((0, 0), (0, 0), (padding, padding), (padding, padding)))
    if stride > 1:
        # TODO(synk): dilation > 1 together with stride > 1 is not implemented.
        assert dilation == 1, "dilation > 1 with stride > 1 is not supported"
        # Space-to-depth so every in-kernel slice stays stride-1.
        x_p = _space_to_depth(x_p, stride)
        w_f = _weight_space_to_depth(w_f, stride)
        dil = 1
    else:
        dil = dilation

    out4 = _conv1_bn_relu_flat(x_p, w_f, shift, dilation=dil, relu=relu,
                               compute_dtype=compute_dtype, out_dtype=out_dtype)
    # Crop the W_pad-wide rows (and any extra space-to-depth row) to the true size.
    return out4[:, :, :H_out, :W_out]


def _reference(x, weight, gamma, beta, running_mean, running_var,
               *, stride, padding, dilation=1, eps=1e-5, relu=True):
    y = jax.lax.conv_general_dilated(
        x, weight, (stride, stride),
        ((padding, padding), (padding, padding)),
        rhs_dilation=(dilation, dilation),
        dimension_numbers=("NCHW", "OIHW", "NCHW"))
    scale = gamma / jnp.sqrt(running_var + eps)
    shift = beta - running_mean * scale
    y = y * scale[None, :, None, None] + shift[None, :, None, None]
    if relu:
        y = jnp.maximum(y, 0.0)
    return y


if __name__ == "__main__":
    key = jax.random.PRNGKey(0)

    def make_params(k, c_in, c_out, ksize):
        kw_, kg, kb, km, kv = jax.random.split(k, 5)
        weight = 0.1 * jax.random.normal(kw_, (c_out, c_in, ksize, ksize), jnp.float32)
        gamma = jax.random.uniform(kg, (c_out,), jnp.float32, 0.5, 1.5)
        beta = 0.1 * jax.random.normal(kb, (c_out,), jnp.float32)
        mean = 0.1 * jax.random.normal(km, (c_out,), jnp.float32)
        var = jax.random.uniform(kv, (c_out,), jnp.float32, 0.5, 1.5)
        return weight, gamma, beta, mean, var

    kx, k1, k2 = jax.random.split(key, 3)
    N, C_in, H, W, C_out = 2, 4, 16, 16, 8
    x = jax.random.normal(kx, (N, C_in, H, W), dtype=jnp.float32)

    # BasicConv(4, 8, kernel_size=3, stride=1, padding=1, relu=True, bn=True)
    p1 = make_params(k1, C_in, C_out, 3)
    out1 = basic_conv_forward(x, *p1, stride=1, padding=1, relu=True)
    out1 = jax.block_until_ready(out1)
    ref1 = _reference(x, *p1, stride=1, padding=1, relu=True)
    np.testing.assert_allclose(np.asarray(out1), np.asarray(ref1),
                               atol=2e-2, rtol=2e-2)
    assert out1.shape == (N, C_out, H, W)

    # BasicConv(4, 8, kernel_size=3, stride=2, padding=1) -- exercises the
    # space-to-depth stride path (all in-kernel slices remain stride-1).
    p2 = make_params(k2, C_in, C_out, 3)
    out2 = basic_conv_forward(x, *p2, stride=2, padding=1, relu=True)
    out2 = jax.block_until_ready(out2)
    ref2 = _reference(x, *p2, stride=2, padding=1, relu=True)
    np.testing.assert_allclose(np.asarray(out2), np.asarray(ref2),
                               atol=2e-2, rtol=2e-2)
    assert out2.shape == (N, C_out, H // 2, W // 2)

    print("KERNEL_OK")
</pallas_src>

<mosaic_0001>
module attributes {stable_mosaic.version = 11 : i64} {
  func.func @_conv_bn_relu_kernel(%arg0: i32, %arg1: memref<2x4x326xbf16, #tpu.memory_space<vmem>>, %arg2: memref<8x36xbf16, #tpu.memory_space<vmem>>, %arg3: memref<8x1xf32, #tpu.memory_space<vmem>>, %arg4: memref<2x8x288xf32, #tpu.memory_space<vmem>>, %arg5: memref<36x288xbf16, #tpu.memory_space<vmem>>) attributes {dimension_semantics = [#tpu.dimension_semantics<parallel>], iteration_bounds = array<i64: 1>, scalar_prefetch = 0 : i64, scratch_operands = 1 : i64, tpu.core_type = #tpu.core_type<tc>, window_params = [{transform_indices = @transform_0, window_bounds = array<i64: 2, 4, 326>}, {pipeline_mode = #tpu.pipeline_mode<synchronous>, transform_indices = @transform_1, window_bounds = array<i64: 8, 36>}, {pipeline_mode = #tpu.pipeline_mode<synchronous>, transform_indices = @transform_2, window_bounds = array<i64: 8, 1>}, {transform_indices = @transform_3, window_bounds = array<i64: 2, 8, 288>}]} {
    %c0 = arith.constant 0 : index
    %c0_0 = arith.constant 0 : index
    %0 = vector.load %arg2[%c0, %c0_0] : memref<8x36xbf16, #tpu.memory_space<vmem>>, vector<8x36xbf16>
    %c0_1 = arith.constant 0 : index
    %c0_2 = arith.constant 0 : index
    %1 = vector.load %arg3[%c0_1, %c0_2] : memref<8x1xf32, #tpu.memory_space<vmem>>, vector<8x1xf32>
    %c0_3 = arith.constant 0 : index
    %c0_4 = arith.constant 0 : index
    %c0_5 = arith.constant 0 : index
    %2 = vector.load %arg1[%c0_3, %c0_4, %c0_5] : memref<2x4x326xbf16, #tpu.memory_space<vmem>>, vector<1x4x288xbf16>
    %3 = vector.shape_cast %2 : vector<1x4x288xbf16> to vector<4x288xbf16>
    %c0_6 = arith.constant 0 : index
    %c0_7 = arith.constant 0 : index
    %4 = vector.load %arg5[%c0_6, %c0_7] : memref<36x288xbf16, #tpu.memory_space<vmem>>, vector<4x288xbf16>
    tpu.vector_store %arg5[%c0_6, %c0_7], %3 {strides = array<i32>} : memref<36x288xbf16, #tpu.memory_space<vmem>>, vector<4x288xbf16>,
    %c0_8 = arith.constant 0 : index
    %c0_9 = arith.constant 0 : index
    %c1 = arith.constant 1 : index
    %5 = vector.load %arg1[%c0_8, %c0_9, %c1] : memref<2x4x326xbf16, #tpu.memory_space<vmem>>, vector<1x4x288xbf16>
    %6 = vector.shape_cast %5 : vector<1x4x288xbf16> to vector<4x288xbf16>
    %c4 = arith.constant 4 : index
    %c0_10 = arith.constant 0 : index
    %7 = vector.load %arg5[%c4, %c0_10] : memref<36x288xbf16, #tpu.memory_space<vmem>>, vector<4x288xbf16>
    tpu.vector_store %arg5[%c4, %c0_10], %6 {strides = array<i32>} : memref<36x288xbf16, #tpu.memory_space<vmem>>, vector<4x288xbf16>,
    %c0_11 = arith.constant 0 : index
    %c0_12 = arith.constant 0 : index
    %c2 = arith.constant 2 : index
    %8 = vector.load %arg1[%c0_11, %c0_12, %c2] : memref<2x4x326xbf16, #tpu.memory_space<vmem>>, vector<1x4x288xbf16>
    %9 = vector.shape_cast %8 : vector<1x4x288xbf16> to vector<4x288xbf16>
    %c8 = arith.constant 8 : index
    %c0_13 = arith.constant 0 : index
    %10 = vector.load %arg5[%c8, %c0_13] : memref<36x288xbf16, #tpu.memory_space<vmem>>, vector<4x288xbf16>
    tpu.vector_store %arg5[%c8, %c0_13], %9 {strides = array<i32>} : memref<36x288xbf16, #tpu.memory_space<vmem>>, vector<4x288xbf16>,
    %c0_14 = arith.constant 0 : index
    %c0_15 = arith.constant 0 : index
    %c18 = arith.constant 18 : index
    %11 = vector.load %arg1[%c0_14, %c0_15, %c18] : memref<2x4x326xbf16, #tpu.memory_space<vmem>>, vector<1x4x288xbf16>
    %12 = vector.shape_cast %11 : vector<1x4x288xbf16> to vector<4x288xbf16>
    %c12 = arith.constant 12 : index
    %c0_16 = arith.constant 0 : index
    %13 = vector.load %arg5[%c12, %c0_16] : memref<36x288xbf16, #tpu.memory_space<vmem>>, vector<4x288xbf16>
    tpu.vector_store %arg5[%c12, %c0_16], %12 {strides = array<i32>} : memref<36x288xbf16, #tpu.memory_space<vmem>>, vector<4x288xbf16>,
    %c0_17 = arith.constant 0 : index
    %c0_18 = arith.constant 0 : index
    %c19 = arith.constant 19 : index
    %14 = vector.load %arg1[%c0_17, %c0_18, %c19] : memref<2x4x326xbf16, #tpu.memory_space<vmem>>, vector<1x4x288xbf16>
    %15 = vector.shape_cast %14 : vector<1x4x288xbf16> to vector<4x288xbf16>
    %c16 = arith.constant 16 : index
    %c0_19 = arith.constant 0 : index
    %16 = vector.load %arg5[%c16, %c0_19] : memref<36x288xbf16, #tpu.memory_space<vmem>>, vector<4x288xbf16>
    tpu.vector_store %arg5[%c16, %c0_19], %15 {strides = array<i32>} : memref<36x288xbf16, #tpu.memory_space<vmem>>, vector<4x288xbf16>,
    %c0_20 = arith.constant 0 : index
    %c0_21 = arith.constant 0 : index
    %c20 = arith.constant 20 : index
    %17 = vector.load %arg1[%c0_20, %c0_21, %c20] : memref<2x4x326xbf16, #tpu.memory_space<vmem>>, vector<1x4x288xbf16>
    %18 = vector.shape_cast %17 : vector<1x4x288xbf16> to vector<4x288xbf16>
    %c20_22 = arith.constant 20 : index
    %c0_23 = arith.constant 0 : index
    %19 = vector.load %arg5[%c20_22, %c0_23] : memref<36x288xbf16, #tpu.memory_space<vmem>>, vector<4x288xbf16>
    tpu.vector_store %arg5[%c20_22, %c0_23], %18 {strides = array<i32>} : memref<36x288xbf16, #tpu.memory_space<vmem>>, vector<4x288xbf16>,
    %c0_24 = arith.constant 0 : index
    %c0_25 = arith.constant 0 : index
    %c36 = arith.constant 36 : index
    %20 = vector.load %arg1[%c0_24, %c0_25, %c36] : memref<2x4x326xbf16, #tpu.memory_space<vmem>>, vector<1x4x288xbf16>
    %21 = vector.shape_cast %20 : vector<1x4x288xbf16> to vector<4x288xbf16>
    %c24 = arith.constant 24 : index
    %c0_26 = arith.constant 0 : index
    %22 = vector.load %arg5[%c24, %c0_26] : memref<36x288xbf16, #tpu.memory_space<vmem>>, vector<4x288xbf16>
    tpu.vector_store %arg5[%c24, %c0_26], %21 {strides = array<i32>} : memref<36x288xbf16, #tpu.memory_space<vmem>>, vector<4x288xbf16>,
    %c0_27 = arith.constant 0 : index
    %c0_28 = arith.constant 0 : index
    %c37 = arith.constant 37 : index
    %23 = vector.load %arg1[%c0_27, %c0_28, %c37] : memref<2x4x326xbf16, #tpu.memory_space<vmem>>, vector<1x4x288xbf16>
    %24 = vector.shape_cast %23 : vector<1x4x288xbf16> to vector<4x288xbf16>
    %c28 = arith.constant 28 : index
    %c0_29 = arith.constant 0 : index
    %25 = vector.load %arg5[%c28, %c0_29] : memref<36x288xbf16, #tpu.memory_space<vmem>>, vector<4x288xbf16>
    tpu.vector_store %arg5[%c28, %c0_29], %24 {strides = array<i32>} : memref<36x288xbf16, #tpu.memory_space<vmem>>, vector<4x288xbf16>,
    %c0_30 = arith.constant 0 : index
    %c0_31 = arith.constant 0 : index
    %c38 = arith.constant 38 : index
    %26 = vector.load %arg1[%c0_30, %c0_31, %c38] : memref<2x4x326xbf16, #tpu.memory_space<vmem>>, vector<1x4x288xbf16>
    %27 = vector.shape_cast %26 : vector<1x4x288xbf16> to vector<4x288xbf16>
    %c32 = arith.constant 32 : index
    %c0_32 = arith.constant 0 : index
    %28 = vector.load %arg5[%c32, %c0_32] : memref<36x288xbf16, #tpu.memory_space<vmem>>, vector<4x288xbf16>
    tpu.vector_store %arg5[%c32, %c0_32], %27 {strides = array<i32>} : memref<36x288xbf16, #tpu.memory_space<vmem>>, vector<4x288xbf16>,
    %c0_33 = arith.constant 0 : index
    %c0_34 = arith.constant 0 : index
    %29 = vector.load %arg5[%c0_33, %c0_34] : memref<36x288xbf16, #tpu.memory_space<vmem>>, vector<36x288xbf16>
    %cst = arith.constant dense<0.000000e+00> : vector<8x288xf32>
    %30 = tpu.matmul %0, %29, %cst {dimension_numbers = #tpu.dot_dimension_numbers<[1], [0], [0], [1], [0, 0, 1, 1], [], []>} : vector<8x36xbf16>, vector<36x288xbf16>, vector<8x288xf32> -> vector<8x288xf32>
    %31 = vector.broadcast %1 : vector<8x1xf32> to vector<8x288xf32>
    %32 = arith.addf %30, %31 : vector<8x288xf32>
    %cst_35 = arith.constant 0.000000e+00 : f32
    %33 = vector.broadcast %cst_35 : f32 to vector<8x288xf32>
    %34 = arith.maximumf %32, %33 : vector<8x288xf32>
    %c0_36 = arith.constant 0 : index
    %c0_37 = arith.constant 0 : index
    %c0_38 = arith.constant 0 : index
    %35 = vector.load %arg4[%c0_36, %c0_37, %c0_38] : memref<2x8x288xf32, #tpu.memory_space<vmem>>, vector<1x8x288xf32>
    %36 = vector.shape_cast %35 : vector<1x8x288xf32> to vector<8x288xf32>
    %37 = vector.shape_cast %34 : vector<8x288xf32> to vector<1x8x288xf32>
    tpu.vector_store %arg4[%c0_36, %c0_37, %c0_38], %37 {strides = array<i32>} : memref<2x8x288xf32, #tpu.memory_space<vmem>>, vector<1x8x288xf32>,
    %c1_39 = arith.constant 1 : index
    %c0_40 = arith.constant 0 : index
    %c0_41 = arith.constant 0 : index
    %38 = vector.load %arg1[%c1_39, %c0_40, %c0_41] : memref<2x4x326xbf16, #tpu.memory_space<vmem>>, vector<1x4x288xbf16>
    %39 = vector.shape_cast %38 : vector<1x4x288xbf16> to vector<4x288xbf16>
    %c0_42 = arith.constant 0 : index
    %c0_43 = arith.constant 0 : index
    %40 = vector.load %arg5[%c0_42, %c0_43] : memref<36x288xbf16, #tpu.memory_space<vmem>>, vector<4x288xbf16>
    tpu.vector_store %arg5[%c0_42, %c0_43], %39 {strides = array<i32>} : memref<36x288xbf16, #tpu.memory_space<vmem>>, vector<4x288xbf16>,
    %c1_44 = arith.constant 1 : index
    %c0_45 = arith.constant 0 : index
    %c1_46 = arith.constant 1 : index
    %41 = vector.load %arg1[%c1_44, %c0_45, %c1_46] : memref<2x4x326xbf16, #tpu.memory_space<vmem>>, vector<1x4x288xbf16>
    %42 = vector.shape_cast %41 : vector<1x4x288xbf16> to vector<4x288xbf16>
    %c4_47 = arith.constant 4 : index
    %c0_48 = arith.constant 0 : index
    %43 = vector.load %arg5[%c4_47, %c0_48] : memref<36x288xbf16, #tpu.memory_space<vmem>>, vector<4x288xbf16>
    tpu.vector_store %arg5[%c4_47, %c0_48], %42 {strides = array<i32>} : memref<36x288xbf16, #tpu.memory_space<vmem>>, vector<4x288xbf16>,
    %c1_49 = arith.constant 1 : index
    %c0_50 = arith.constant 0 : index
    %c2_51 = arith.constant 2 : index
    %44 = vector.load %arg1[%c1_49, %c0_50, %c2_51] : memref<2x4x326xbf16, #tpu.memory_space<vmem>>, vector<1x4x288xbf16>
    %45 = vector.shape_cast %44 : vector<1x4x288xbf16> to vector<4x288xbf16>
    %c8_52 = arith.constant 8 : index
    %c0_53 = arith.constant 0 : index
    %46 = vector.load %arg5[%c8_52, %c0_53] : memref<36x288xbf16, #tpu.memory_space<vmem>>, vector<4x288xbf16>
    tpu.vector_store %arg5[%c8_52, %c0_53], %45 {strides = array<i32>} : memref<36x288xbf16, #tpu.memory_space<vmem>>, vector<4x288xbf16>,
    %c1_54 = arith.constant 1 : index
    %c0_55 = arith.constant 0 : index
    %c18_56 = arith.constant 18 : index
    %47 = vector.load %arg1[%c1_54, %c0_55, %c18_56] : memref<2x4x326xbf16, #tpu.memory_space<vmem>>, vector<1x4x288xbf16>
    %48 = vector.shape_cast %47 : vector<1x4x288xbf16> to vector<4x288xbf16>
    %c12_57 = arith.constant 12 : index
    %c0_58 = arith.constant 0 : index
    %49 = vector.load %arg5[%c12_57, %c0_58] : memref<36x288xbf16, #tpu.memory_space<vmem>>, vector<4x288xbf16>
    tpu.vector_store %arg5[%c12_57, %c0_58], %48 {strides = array<i32>} : memref<36x288xbf16, #tpu.memory_space<vmem>>, vector<4x288xbf16>,
    %c1_59 = arith.constant 1 : index
    %c0_60 = arith.constant 0 : index
    %c19_61 = arith.constant 19 : index
    %50 = vector.load %arg1[%c1_59, %c0_60, %c19_61] : memref<2x4x326xbf16, #tpu.memory_space<vmem>>, vector<1x4x288xbf16>
    %51 = vector.shape_cast %50 : vector<1x4x288xbf16> to vector<4x288xbf16>
    %c16_62 = arith.constant 16 : index
    %c0_63 = arith.constant 0 : index
    %52 = vector.load %arg5[%c16_62, %c0_63] : memref<36x288xbf16, #tpu.memory_space<vmem>>, vector<4x288xbf16>
    tpu.vector_store %arg5[%c16_62, %c0_63], %51 {strides = array<i32>} : memref<36x288xbf16, #tpu.memory_space<vmem>>, vector<4x288xbf16>,
    %c1_64 = arith.constant 1 : index
    %c0_65 = arith.constant 0 : index
    %c20_66 = arith.constant 20 : index
    %53 = vector.load %arg1[%c1_64, %c0_65, %c20_66] : memref<2x4x326xbf16, #tpu.memory_space<vmem>>, vector<1x4x288xbf16>
    %54 = vector.shape_cast %53 : vector<1x4x288xbf16> to vector<4x288xbf16>
    %c20_67 = arith.constant 20 : index
    %c0_68 = arith.constant 0 : index
    %55 = vector.load %arg5[%c20_67, %c0_68] : memref<36x288xbf16, #tpu.memory_space<vmem>>, vector<4x288xbf16>
    tpu.vector_store %arg5[%c20_67, %c0_68], %54 {strides = array<i32>} : memref<36x288xbf16, #tpu.memory_space<vmem>>, vector<4x288xbf16>,
    %c1_69 = arith.constant 1 : index
    %c0_70 = arith.constant 0 : index
    %c36_71 = arith.constant 36 : index
    %56 = vector.load %arg1[%c1_69, %c0_70, %c36_71] : memref<2x4x326xbf16, #tpu.memory_space<vmem>>, vector<1x4x288xbf16>
    %57 = vector.shape_cast %56 : vector<1x4x288xbf16> to vector<4x288xbf16>
    %c24_72 = arith.constant 24 : index
    %c0_73 = arith.constant 0 : index
    %58 = vector.load %arg5[%c24_72, %c0_73] : memref<36x288xbf16, #tpu.memory_space<vmem>>, vector<4x288xbf16>
    tpu.vector_store %arg5[%c24_72, %c0_73], %57 {strides = array<i32>} : memref<36x288xbf16, #tpu.memory_space<vmem>>, vector<4x288xbf16>,
    %c1_74 = arith.constant 1 : index
    %c0_75 = arith.constant 0 : index
    %c37_76 = arith.constant 37 : index
    %59 = vector.load %arg1[%c1_74, %c0_75, %c37_76] : memref<2x4x326xbf16, #tpu.memory_space<vmem>>, vector<1x4x288xbf16>
    %60 = vector.shape_cast %59 : vector<1x4x288xbf16> to vector<4x288xbf16>
    %c28_77 = arith.constant 28 : index
    %c0_78 = arith.constant 0 : index
    %61 = vector.load %arg5[%c28_77, %c0_78] : memref<36x288xbf16, #tpu.memory_space<vmem>>, vector<4x288xbf16>
    tpu.vector_store %arg5[%c28_77, %c0_78], %60 {strides = array<i32>} : memref<36x288xbf16, #tpu.memory_space<vmem>>, vector<4x288xbf16>,
    %c1_79 = arith.constant 1 : index
    %c0_80 = arith.constant 0 : index
    %c38_81 = arith.constant 38 : index
    %62 = vector.load %arg1[%c1_79, %c0_80, %c38_81] : memref<2x4x326xbf16, #tpu.memory_space<vmem>>, vector<1x4x288xbf16>
    %63 = vector.shape_cast %62 : vector<1x4x288xbf16> to vector<4x288xbf16>
    %c32_82 = arith.constant 32 : index
    %c0_83 = arith.constant 0 : index
    %64 = vector.load %arg5[%c32_82, %c0_83] : memref<36x288xbf16, #tpu.memory_space<vmem>>, vector<4x288xbf16>
    tpu.vector_store %arg5[%c32_82, %c0_83], %63 {strides = array<i32>} : memref<36x288xbf16, #tpu.memory_space<vmem>>, vector<4x288xbf16>,
    %c0_84 = arith.constant 0 : index
    %c0_85 = arith.constant 0 : index
    %65 = vector.load %arg5[%c0_84, %c0_85] : memref<36x288xbf16, #tpu.memory_space<vmem>>, vector<36x288xbf16>
    %cst_86 = arith.constant dense<0.000000e+00> : vector<8x288xf32>
    %66 = tpu.matmul %0, %65, %cst_86 {dimension_numbers = #tpu.dot_dimension_numbers<[1], [0], [0], [1], [0, 0, 1, 1], [], []>} : vector<8x36xbf16>, vector<36x288xbf16>, vector<8x288xf32> -> vector<8x288xf32>
    %67 = vector.broadcast %1 : vector<8x1xf32> to vector<8x288xf32>
    %68 = arith.addf %66, %67 : vector<8x288xf32>
    %cst_87 = arith.constant 0.000000e+00 : f32
    %69 = vector.broadcast %cst_87 : f32 to vector<8x288xf32>
    %70 = arith.maximumf %68, %69 : vector<8x288xf32>
    %c1_88 = arith.constant 1 : index
    %c0_89 = arith.constant 0 : index
    %c0_90 = arith.constant 0 : index
    %71 = vector.load %arg4[%c1_88, %c0_89, %c0_90] : memref<2x8x288xf32, #tpu.memory_space<vmem>>, vector<1x8x288xf32>
    %72 = vector.shape_cast %71 : vector<1x8x288xf32> to vector<8x288xf32>
    %73 = vector.shape_cast %70 : vector<8x288xf32> to vector<1x8x288xf32>
    tpu.vector_store %arg4[%c1_88, %c0_89, %c0_90], %73 {strides = array<i32>} : memref<2x8x288xf32, #tpu.memory_space<vmem>>, vector<1x8x288xf32>,
    return
  }
  func.func @transform_0(%arg0: i32) -> (i32, i32, i32) {
    %c0_i32 = arith.constant 0 : i32
    %c0_i32_0 = arith.constant 0 : i32
    %c0_i32_1 = arith.constant 0 : i32
    return %arg0, %c0_i32, %c0_i32_0 : i32, i32, i32
  }
  func.func @transform_1(%arg0: i32) -> (i32, i32) {
    %c0_i32 = arith.constant 0 : i32
    %c0_i32_0 = arith.constant 0 : i32
    %c0_i32_1 = arith.constant 0 : i32
    return %c0_i32, %c0_i32_0 : i32, i32
  }
  func.func @transform_2(%arg0: i32) -> (i32, i32) {
    %c0_i32 = arith.constant 0 : i32
    %c0_i32_0 = arith.constant 0 : i32
    %c0_i32_1 = arith.constant 0 : i32
    return %c0_i32, %c0_i32_0 : i32, i32
  }
  func.func @transform_3(%arg0: i32) -> (i32, i32, i32) {
    %c0_i32 = arith.constant 0 : i32
    %c0_i32_0 = arith.constant 0 : i32
    %c0_i32_1 = arith.constant 0 : i32
    return %arg0, %c0_i32, %c0_i32_0 : i32, i32, i32
  }
}

</mosaic_0001>

<llo_original>
// kernel: tpu_custom_call.1
$region0: #{tpu_custom_call.1}
  #allocation0 [shape = 'u32[]', space=smem, size = 0x4, offset = 0x4, fixed_abs, tag = 'smem constant byte address 0x4 - core index']
  #allocation1 [shape = 'u32[144,128]{1,0:T(1,128)}', space=vmem, size = 0x12000, scoped, tag = 'internal scratch']
  #allocation2 [shape = 'bf16[36,288]{1,0:T(8,128)(2,1)}', space=vmem, size = 0x7800, scoped, tag = 'scratch operand']
  %s0 = inlined_call_operand.hbm [shape: bf16[2,4,326], index: 0, kind: input, shape index: {}]
  %s1 = inlined_call_operand.vmem [shape: bf16[8,36], index: 1, kind: input, shape index: {}]
  %s2 = inlined_call_operand.vmem [shape: f32[8,1], index: 2, kind: input, shape index: {}]
  %s3 = inlined_call_operand.hbm [shape: f32[2,8,288], index: 3, kind: output, shape index: {}]
  %s4 = sld [smem:[#allocation0]]
  $region26: #{tpu_custom_call.1} parent=0
    _
  %s6 = ssub.s32 1, %s4
  %s7 = scalar_select 0, %s6, %s4
  $region1: #{tpu_custom_call.1} parent=0
    #allocation3 [shape = 'u8[6144]{0}', space=vmem, size = 0x1800, scoped, tag = 'input window, operand 0, single buffered']
    #allocation4 [shape = 's32[1]{0}', space=sflag, size = 0x4, scoped, tag = 'scoped memory for tpu_custom_call.1']
    #allocation5 [shape = 's32[1]{0}', space=sflag, size = 0x4, scoped, tag = 'scoped memory for tpu_custom_call.1']
    #allocation6 [shape = 'u8[24576]{0}', space=vmem, size = 0x6000, scoped, tag = 'output window, operand 0, single buffered']
    %8 = vsyncpa [#allocation4], 0
    %9 = vsyncpa [#allocation5], 0
    // Predicated region
    $region2: #{tpu_custom_call.1} parent=1 // pred_check
      _
    $region3: #{tpu_custom_call.1} parent=1 // pred_check_branch
      %11 = sbr.rel (0) target = $region5
    $region4: #{tpu_custom_call.1} parent=1 // pred_region
      %s13 = ssub.s32 192, 192
      %14 = vsyncadd [#allocation4], %s13
      %s15 = sshll.u32 [#allocation3], 4
      %s16 = int_to_ptr.vmem [resolvable:$true] %s15
      %21 = dma.hbm_to_vmem [thread:$0]  %s0, 192, %s16, [#allocation4], 96, 96, 6
    $region5: #{tpu_custom_call.1} parent=1 // pred_fallthru
      _
    // Predicated region
    $region6: #{tpu_custom_call.1} parent=1 // pred_check
      _
    $region7: #{tpu_custom_call.1} parent=1 // pred_check_branch
      %23 = sbr.rel (0) target = $region9
    $region8: #{tpu_custom_call.1} parent=1 // pred_region
      _
    $region9: #{tpu_custom_call.1} parent=1 // pred_fallthru
      _
    // Predicated region
    $region10: #{tpu_custom_call.1} parent=1 // pred_check
      _
    $region11: #{tpu_custom_call.1} parent=1 // pred_check_branch
      %25 = sbr.rel (0) target = $region13
    $region12: #{tpu_custom_call.1} parent=1 // pred_region
      _
    $region13: #{tpu_custom_call.1} parent=1 // pred_fallthru
      _
    // Predicated region
    $region14: #{tpu_custom_call.1} parent=1 // pred_check
      _
    $region15: #{tpu_custom_call.1} parent=1 // pred_check_branch
      %27 = sbr.rel (0) target = $region17
    $region16: #{tpu_custom_call.1} parent=1 // pred_region
      %28 = dma.done [#allocation4], 192
    $region17: #{tpu_custom_call.1} parent=1 // pred_fallthru
      _
    %v30 = vld [vmem:[%s1] sm:$0xf]
    %v31 = vld [vmem:[%s2] sm:$0xff]
    %v32 = vld [vmem:[#allocation3] sm:$0x3f]
    %v34 = vcombine.high %v32, %v32
    %v36 = vunpack.c.l.s4 1983009808
    %v37 = vunpack.c.0.s8 %v36
    %v38 = vlaneseq
    %v39 = vshrl.u32 %v38, 7
    %v40 = vsub.s32 %v37, %v39
    %v41 = vrot.slane %v32, %v40
    %v43 = vunpack.c.l.s4 1983009808
    %v44 = vunpack.c.0.s8 %v43
    %v45 = vlaneseq
    %v46 = vshrl.u32 %v45, 7
    %v47 = vsub.s32 %v44, %v46
    %v48 = vrot.slane %v34, %v47
    %51 = vst [vmem:[#allocation2] sm:$0x33] %v41
    %vm52 = vcmask 254976
    %53 = vst.msk [vmem:[#allocation2 + $0x8] sm:$0x3] %vm52, %v48
    %v54 = vld [vmem:[#allocation3] sm:$0x3f]
    %v56 = vcombine.low %v54, %v54
    %v58 = vunpack.c.l.s4 1983009808
    %v59 = vunpack.c.0.s8 %v58
    %v60 = vlaneseq
    %v61 = vshrl.u32 %v60, 7
    %v62 = vsub.s32 %v59, %v61
    %v63 = vrot.slane %v56, %v62
    %v65 = vunpack.c.l.s4 1983009808
    %v66 = vunpack.c.0.s8 %v65
    %v67 = vlaneseq
    %v68 = vshrl.u32 %v67, 7
    %v69 = vsub.s32 %v66, %v68
    %v70 = vrot.slane %v54, %v69
    %71 = vrot.lane.b32.xlu0 %v63, 127
    %v72 = vpop.permute.xlu0 %71
    %73 = vrot.lane.b32.xlu0 %v70, 127
    %v74 = vpop.permute.xlu0 %73
    %v75 = vrot.slane %v72, 4
    %v76 = vrot.slane %v74, 4
    %vm77 = vcmask 1043456
    %v78 = vsel %vm77, %v75, %v76
    %vm79 = vcmask 1039360
    %v80 = vsel %vm79, %v72, %v78
    %83 = vst [vmem:[#allocation2] sm:$0xcc] %v80
    %vm84 = vcmask 257026
    %85 = vst.msk [vmem:[#allocation2 + $0x8] sm:$0xc] %vm84, %v74
    %v86 = vld [vmem:[#allocation3] sm:$0x3f]
    %v88 = vcombine.high %v86, %v86
    %v90 = vunpack.c.l.s4 1983009808
    %v91 = vunpack.c.0.s8 %v90
    %v92 = vlaneseq
    %v93 = vshrl.u32 %v92, 7
    %v94 = vsub.s32 %v91, %v93
    %v95 = vrot.slane %v86, %v94
    %v97 = vunpack.c.l.s4 1983009808
    %v98 = vunpack.c.0.s8 %v97
    %v99 = vlaneseq
    %v100 = vshrl.u32 %v99, 7
    %v101 = vsub.s32 %v98, %v100
    %v102 = vrot.slane %v88, %v101
    %103 = vrot.lane.b32.xlu0 %v95, 126
    %v104 = vpop.permute.xlu0 %103
    %105 = vrot.lane.b32.xlu0 %v102, 126
    %v106 = vpop.permute.xlu0 %105
    %v107 = vrot.slane %v104, 4
    %v108 = vrot.slane %v106, 4
    %v109 = vsel %vm77, %v107, %v108
    %vm110 = vcmask 1031168
    %v111 = vsel %vm110, %v104, %v109
    %114 = vst [vmem:[#allocation2 + $0xc] sm:$0x33] %v111
    %115 = vst.msk [vmem:[#allocation2 + $0x14] sm:$0x3] %vm52, %v106
    %v116 = vld [vmem:[#allocation3] sm:$0x3f]
    %v118 = vcombine.low %v116, %v116
    %v120 = vunpack.c.l.s4 1983009808
    %v121 = vunpack.c.0.s8 %v120
    %v122 = vlaneseq
    %v123 = vshrl.u32 %v122, 7
    %v124 = vsub.s32 %v121, %v123
    %v125 = vrot.slane %v118, %v124
    %v127 = vunpack.c.l.s4 1983009808
    %v128 = vunpack.c.0.s8 %v127
    %v129 = vlaneseq
    %v130 = vshrl.u32 %v129, 7
    %v131 = vsub.s32 %v128, %v130
    %v132 = vrot.slane %v116, %v131
    %133 = vrot.lane.b32.xlu0 %v125, 110
    %v134 = vpop.permute.xlu0 %133
    %135 = vrot.lane.b32.xlu0 %v132, 110
    %v136 = vpop.permute.xlu0 %135
    %v137 = vrot.slane %v134, 4
    %v138 = vrot.slane %v136, 4
    %v139 = vsel %vm77, %v137, %v138
    %vm140 = vcmask 900096
    %v141 = vsel %vm140, %v134, %v139
    %144 = vst [vmem:[#allocation2 + $0xc] sm:$0xcc] %v141
    %145 = vst.msk [vmem:[#allocation2 + $0x14] sm:$0xc] %vm84, %v136
    %v146 = vld [vmem:[#allocation3] sm:$0x3f]
    %v148 = vcombine.high %v146, %v146
    %v150 = vunpack.c.l.s4 1983009808
    %v151 = vunpack.c.0.s8 %v150
    %v152 = vlaneseq
    %v153 = vshrl.u32 %v152, 7
    %v154 = vsub.s32 %v151, %v153
    %v155 = vrot.slane %v146, %v154
    %v157 = vunpack.c.l.s4 1983009808
    %v158 = vunpack.c.0.s8 %v157
    %v159 = vlaneseq
    %v160 = vshrl.u32 %v159, 7
    %v161 = vsub.s32 %v158, %v160
    %v162 = vrot.slane %v148, %v161
    %163 = vrot.lane.b32.xlu0 %v155, 109
    %v164 = vpop.permute.xlu0 %163
    %165 = vrot.lane.b32.xlu0 %v162, 109
    %v166 = vpop.permute.xlu0 %165
    %v167 = vrot.slane %v164, 4
    %v168 = vrot.slane %v166, 4
    %v169 = vsel %vm77, %v167, %v168
    %vm170 = vcmask 891904
    %v171 = vsel %vm170, %v164, %v169
    %174 = vst [vmem:[#allocation2 + $0x18] sm:$0x33] %v171
    %175 = vst.msk [vmem:[#allocation2 + $0x20] sm:$0x3] %vm52, %v166
    %v176 = vld [vmem:[#allocation3] sm:$0x3f]
    %v178 = vcombine.low %v176, %v176
    %v180 = vunpack.c.l.s4 1983009808
    %v181 = vunpack.c.0.s8 %v180
    %v182 = vlaneseq
    %v183 = vshrl.u32 %v182, 7
    %v184 = vsub.s32 %v181, %v183
    %v185 = vrot.slane %v178, %v184
    %v187 = vunpack.c.l.s4 1983009808
    %v188 = vunpack.c.0.s8 %v187
    %v189 = vlaneseq
    %v190 = vshrl.u32 %v189, 7
    %v191 = vsub.s32 %v188, %v190
    %v192 = vrot.slane %v176, %v191
    %193 = vrot.lane.b32.xlu0 %v185, 108
    %v194 = vpop.permute.xlu0 %193
    %195 = vrot.lane.b32.xlu0 %v192, 108
    %v196 = vpop.permute.xlu0 %195
    %v197 = vrot.slane %v194, 4
    %v198 = vrot.slane %v196, 4
    %v199 = vsel %vm77, %v197, %v198
    %vm200 = vcmask 883712
    %v201 = vsel %vm200, %v194, %v199
    %204 = vst [vmem:[#allocation2 + $0x18] sm:$0xcc] %v201
    %205 = vst.msk [vmem:[#allocation2 + $0x20] sm:$0xc] %vm84, %v196
    %v206 = vld [vmem:[#allocation3] sm:$0x3f]
    %v208 = vcombine.high %v206, %v206
    %v210 = vunpack.c.l.s4 1983009808
    %v211 = vunpack.c.0.s8 %v210
    %v212 = vlaneseq
    %v213 = vshrl.u32 %v212, 7
    %v214 = vsub.s32 %v211, %v213
    %v215 = vrot.slane %v206, %v214
    %v217 = vunpack.c.l.s4 1983009808
    %v218 = vunpack.c.0.s8 %v217
    %v219 = vlaneseq
    %v220 = vshrl.u32 %v219, 7
    %v221 = vsub.s32 %v218, %v220
    %v222 = vrot.slane %v208, %v221
    %223 = vrot.lane.b32.xlu0 %v215, 92
    %v224 = vpop.permute.xlu0 %223
    %225 = vrot.lane.b32.xlu0 %v222, 92
    %v226 = vpop.permute.xlu0 %225
    %v227 = vrot.slane %v224, 4
    %v228 = vrot.slane %v226, 4
    %v229 = vsel %vm77, %v227, %v228
    %vm230 = vcmask 752640
    %v231 = vsel %vm230, %v224, %v229
    %234 = vst [vmem:[#allocation2 + $0x24] sm:$0x33] %v231
    %235 = vst.msk [vmem:[#allocation2 + $0x2c] sm:$0x3] %vm52, %v226
    %v236 = vld [vmem:[#allocation3] sm:$0x3f]
    %v238 = vcombine.low %v236, %v236
    %v240 = vunpack.c.l.s4 1983009808
    %v241 = vunpack.c.0.s8 %v240
    %v242 = vlaneseq
    %v243 = vshrl.u32 %v242, 7
    %v244 = vsub.s32 %v241, %v243
    %v245 = vrot.slane %v238, %v244
    %v247 = vunpack.c.l.s4 1983009808
    %v248 = vunpack.c.0.s8 %v247
    %v249 = vlaneseq
    %v250 = vshrl.u32 %v249, 7
    %v251 = vsub.s32 %v248, %v250
    %v252 = vrot.slane %v236, %v251
    %253 = vrot.lane.b32.xlu0 %v245, 91
    %v254 = vpop.permute.xlu0 %253
    %255 = vrot.lane.b32.xlu0 %v252, 91
    %v256 = vpop.permute.xlu0 %255
    %v257 = vrot.slane %v254, 4
    %v258 = vrot.slane %v256, 4
    %v259 = vsel %vm77, %v257, %v258
    %vm260 = vcmask 744448
    %v261 = vsel %vm260, %v254, %v259
    %264 = vst [vmem:[#allocation2 + $0x24] sm:$0xcc] %v261
    %265 = vst.msk [vmem:[#allocation2 + $0x2c] sm:$0xc] %vm84, %v256
    %v266 = vld [vmem:[#allocation3] sm:$0x3f]
    %v268 = vcombine.high %v266, %v266
    %v270 = vunpack.c.l.s4 1983009808
    %v271 = vunpack.c.0.s8 %v270
    %v272 = vlaneseq
    %v273 = vshrl.u32 %v272, 7
    %v274 = vsub.s32 %v271, %v273
    %v275 = vrot.slane %v266, %v274
    %v277 = vunpack.c.l.s4 1983009808
    %v278 = vunpack.c.0.s8 %v277
    %v279 = vlaneseq
    %v280 = vshrl.u32 %v279, 7
    %v281 = vsub.s32 %v278, %v280
    %v282 = vrot.slane %v268, %v281
    %283 = vrot.lane.b32.xlu0 %v275, 90
    %v284 = vpop.permute.xlu0 %283
    %285 = vrot.lane.b32.xlu0 %v282, 90
    %v286 = vpop.permute.xlu0 %285
    %v287 = vrot.slane %v284, 4
    %v288 = vrot.slane %v286, 4
    %v289 = vsel %vm77, %v287, %v288
    %vm290 = vcmask 736256
    %v291 = vsel %vm290, %v284, %v289
    %294 = vst [vmem:[#allocation2 + $0x30] sm:$0x33] %v291
    %295 = vst.msk [vmem:[#allocation2 + $0x38] sm:$0x3] %vm52, %v286
    %v296 = vld [vmem:[#allocation2] sm:$0xff]
    %v297 = vld [vmem:[#allocation2 + $0x8] sm:$0xf]
    %v298 = vld [vmem:[#allocation2 + $0xc] sm:$0xff]
    %v299 = vld [vmem:[#allocation2 + $0x14] sm:$0xf]
    %v300 = vld [vmem:[#allocation2 + $0x18] sm:$0xff]
    %v301 = vld [vmem:[#allocation2 + $0x20] sm:$0xf]
    %v302 = vld [vmem:[#allocation2 + $0x24] sm:$0xff]
    %v303 = vld [vmem:[#allocation2 + $0x2c] sm:$0xf]
    %v304 = vld [vmem:[#allocation2 + $0x30] sm:$0x33]
    %v305 = vld [vmem:[#allocation2 + $0x38] sm:$0x3]
    %307 = vset.pattern.permute.xlu0 0
    %308 = vperm.xlu0 %307, %v31
    %v309 = vpop.permute.xlu0 %308
    %v321 = vunpack.c.l.b16 %v296
    %v322 = vunpack.c.h.b16 %v296
    %v323 = vunpack.c.l.b16 %v297
    %v324 = vunpack.c.l.b16 %v298
    %v325 = vunpack.c.h.b16 %v298
    %v326 = vunpack.c.l.b16 %v299
    %v327 = vunpack.c.l.b16 %v300
    %v328 = vunpack.c.h.b16 %v300
    %v329 = vunpack.c.l.b16 %v301
    %v330 = vunpack.c.l.b16 %v302
    %v331 = vunpack.c.h.b16 %v302
    %v332 = vunpack.c.l.b16 %v303
    %v333 = vunpack.c.l.b16 %v304
    %v334 = vunpack.c.h.b16 %v304
    %v335 = vunpack.c.l.b16 %v305
    %v336 = vpack.c.b16 %v324, %v321
    %v337 = vpack.c.b16 %v325, %v322
    %v338 = vpack.c.b16 %v326, %v323
    %v339 = vpack.c.b16 %v330, %v327
    %v340 = vpack.c.b16 %v331, %v328
    %v341 = vpack.c.b16 %v332, %v329
    %v342 = vpack.c.b16 %v333, %v333
    %v343 = vpack.c.b16 %v334, %v334
    %v344 = vpack.c.b16 %v335, %v335
    %vm351 = vcmask 293888
    %v353 = vsel %vm351, %v30, 0
    %vm355 = vcmask 1041408
    %v357 = vsel %vm355, %v342, 0
    %v360 = vsel %vm355, %v343, 0
    %v363 = vsel %vm355, %v344, 0
    %365 = vmatprep.subr.bf16.mxu0 %v337
    %366 = vmatpush1.bf16.msra.mxu0 %v336
    %367 = vmatprep.subr.bf16.mxu0 %v340
    %368 = vmatpush1.bf16.msra.mxu0 %v339
    %369 = vmatprep.subr.bf16.mxu0 %v360
    %370 = vmatpush1.bf16.msra.mxu0 %v357
    %371 = vmatprep.subr.bf16.mxu0 0
    %372 = vmatpush1.bf16.msra.mxu0 0
    %373 = vmatprep.subr.bf16.mxu0 0
    %374 = vmatpush1.bf16.msra.mxu0 0
    %375 = vmatprep.subr.bf16.mxu0 0
    %376 = vmatpush1.bf16.msra.mxu0 0
    %377 = vmatprep.subr.bf16.mxu0 0
    %378 = vmatpush1.bf16.msra.mxu0 0
    %379 = vmatprep.subr.bf16.mxu0 0
    %380 = vmatpush1.bf16.msra.mxu0 0
    %381 = vmatprep.subr.bf16.mxu0 0
    %382 = vmatpush1.bf16.msra.mxu0 0
    %383 = vmatprep.subr.bf16.mxu0 0
    %384 = vmatpush1.bf16.msra.mxu0 0
    %385 = vmatprep.subr.bf16.mxu0 0
    %386 = vmatpush1.bf16.msra.mxu0 0
    %387 = vmatprep.subr.bf16.mxu0 0
    %388 = vmatpush1.bf16.msra.mxu0 0
    %389 = vmatprep.subr.bf16.mxu0 0
    %390 = vmatpush1.bf16.msra.mxu0 0
    %391 = vmatprep.subr.bf16.mxu0 0
    %392 = vmatpush1.bf16.msra.mxu0 0
    %393 = vmatprep.subr.bf16.mxu0 0
    %394 = vmatpush1.bf16.msra.mxu0 0
    %395 = vmatprep.subr.bf16.mxu0 0
    %396 = vmatpush1.bf16.msra.mxu0 0
    %397 = vmatprep.mubr.bf16.mxu0 0
    %398 = vmatmul.mubr.bf16.gmra.mrb[0].mxu0 %v353
    %v399 = vpop.f32.mrb[0].mxu0
    %v400 = vadd.f32 %v309, %v399
    %v401 = vpop.f32.mrb[0].mxu0
    %v402 = vadd.f32 %v309, %v401
    %v403 = vpop.f32.mrb[0].mxu0
    %v404 = vpop.f32.mrb[0].mxu0
    %405 = vdwg.mxu0
    %406 = vmatprep.subr.bf16.mxu0 0
    %407 = vmatpush1.bf16.msra.mxu0 %v338
    %408 = vmatprep.subr.bf16.mxu0 0
    %409 = vmatpush1.bf16.msra.mxu0 %v341
    %410 = vmatprep.subr.bf16.mxu0 0
    %411 = vmatpush1.bf16.msra.mxu0 %v363
    %412 = vmatprep.subr.bf16.mxu0 0
    %413 = vmatpush1.bf16.msra.mxu0 0
    %414 = vmatprep.subr.bf16.mxu0 0
    %415 = vmatpush1.bf16.msra.mxu0 0
    %416 = vmatprep.subr.bf16.mxu0 0
    %417 = vmatpush1.bf16.msra.mxu0 0
    %418 = vmatprep.subr.bf16.mxu0 0
    %419 = vmatpush1.bf16.msra.mxu0 0
    %420 = vmatprep.subr.bf16.mxu0 0
    %421 = vmatpush1.bf16.msra.mxu0 0
    %422 = vmatprep.subr.bf16.mxu0 0
    %423 = vmatpush1.bf16.msra.mxu0 0
    %424 = vmatprep.subr.bf16.mxu0 0
    %425 = vmatpush1.bf16.msra.mxu0 0
    %426 = vmatprep.subr.bf16.mxu0 0
    %427 = vmatpush1.bf16.msra.mxu0 0
    %428 = vmatprep.subr.bf16.mxu0 0
    %429 = vmatpush1.bf16.msra.mxu0 0
    %430 = vmatprep.subr.bf16.mxu0 0
    %431 = vmatpush1.bf16.msra.mxu0 0
    %432 = vmatprep.subr.bf16.mxu0 0
    %433 = vmatpush1.bf16.msra.mxu0 0
    %434 = vmatprep.subr.bf16.mxu0 0
    %435 = vmatpush1.bf16.msra.mxu0 0
    %436 = vmatprep.subr.bf16.mxu0 0
    %437 = vmatpush1.bf16.msra.mxu0 0
    %438 = vmatprep.mubr.bf16.mxu0 0
    %439 = vmatmul.mubr.bf16.gmra.mrb[0].mxu0 %v353
    %v440 = vpop.f32.mrb[0].mxu0
    %v441 = vadd.f32 %v309, %v440
    %v442 = vpop.f32.mrb[0].mxu0
    %v443 = vpop.f32.mrb[0].mxu0
    %v444 = vpop.f32.mrb[0].mxu0
    %445 = vdwg.mxu0
    %v446 = vmax.f32 %v400, 0.0
    %v447 = vmax.f32 %v402, 0.0
    %v448 = vmax.f32 %v441, 0.0
    %449 = vst [vmem:[#allocation6] sm:$0xff] %v446
    %450 = vst [vmem:[#allocation6 + $0x8] sm:$0xff] %v447
    %vm451 = vcmask 261120
    %452 = vst.msk [vmem:[#allocation6 + $0x10] sm:$0xff] %vm451, %v448
    %s453 = scalar_lea.vmem [#allocation3], 6
    %v454 = vld [vmem:[%s453] sm:$0x3f]
    %v456 = vcombine.high %v454, %v454
    %v458 = vunpack.c.l.s4 1983009808
    %v459 = vunpack.c.0.s8 %v458
    %v460 = vlaneseq
    %v461 = vshrl.u32 %v460, 7
    %v462 = vsub.s32 %v459, %v461
    %v463 = vrot.slane %v454, %v462
    %v465 = vunpack.c.l.s4 1983009808
    %v466 = vunpack.c.0.s8 %v465
    %v467 = vlaneseq
    %v468 = vshrl.u32 %v467, 7
    %v469 = vsub.s32 %v466, %v468
    %v470 = vrot.slane %v456, %v469
    %473 = vst [vmem:[#allocation2] sm:$0x33] %v463
    %474 = vst.msk [vmem:[#allocation2 + $0x8] sm:$0x3] %vm52, %v470
    %v475 = vld [vmem:[%s453] sm:$0x3f]
    %v477 = vcombine.low %v475, %v475
    %v479 = vunpack.c.l.s4 1983009808
    %v480 = vunpack.c.0.s8 %v479
    %v481 = vlaneseq
    %v482 = vshrl.u32 %v481, 7
    %v483 = vsub.s32 %v480, %v482
    %v484 = vrot.slane %v477, %v483
    %v486 = vunpack.c.l.s4 1983009808
    %v487 = vunpack.c.0.s8 %v486
    %v488 = vlaneseq
    %v489 = vshrl.u32 %v488, 7
    %v490 = vsub.s32 %v487, %v489
    %v491 = vrot.slane %v475, %v490
    %492 = vrot.lane.b32.xlu0 %v484, 127
    %v493 = vpop.permute.xlu0 %492
    %494 = vrot.lane.b32.xlu0 %v491, 127
    %v495 = vpop.permute.xlu0 %494
    %v496 = vrot.slane %v493, 4
    %v497 = vrot.slane %v495, 4
    %v498 = vsel %vm77, %v496, %v497
    %v499 = vsel %vm79, %v493, %v498
    %502 = vst [vmem:[#allocation2] sm:$0xcc] %v499
    %503 = vst.msk [vmem:[#allocation2 + $0x8] sm:$0xc] %vm84, %v495
    %v504 = vld [vmem:[%s453] sm:$0x3f]
    %v506 = vcombine.high %v504, %v504
    %v508 = vunpack.c.l.s4 1983009808
    %v509 = vunpack.c.0.s8 %v508
    %v510 = vlaneseq
    %v511 = vshrl.u32 %v510, 7
    %v512 = vsub.s32 %v509, %v511
    %v513 = vrot.slane %v504, %v512
    %v515 = vunpack.c.l.s4 1983009808
    %v516 = vunpack.c.0.s8 %v515
    %v517 = vlaneseq
    %v518 = vshrl.u32 %v517, 7
    %v519 = vsub.s32 %v516, %v518
    %v520 = vrot.slane %v506, %v519
    %521 = vrot.lane.b32.xlu0 %v513, 126
    %v522 = vpop.permute.xlu0 %521
    %523 = vrot.lane.b32.xlu0 %v520, 126
    %v524 = vpop.permute.xlu0 %523
    %v525 = vrot.slane %v522, 4
    %v526 = vrot.slane %v524, 4
    %v527 = vsel %vm77, %v525, %v526
    %v528 = vsel %vm110, %v522, %v527
    %531 = vst [vmem:[#allocation2 + $0xc] sm:$0x33] %v528
    %532 = vst.msk [vmem:[#allocation2 + $0x14] sm:$0x3] %vm52, %v524
    %v533 = vld [vmem:[%s453] sm:$0x3f]
    %v535 = vcombine.low %v533, %v533
    %v537 = vunpack.c.l.s4 1983009808
    %v538 = vunpack.c.0.s8 %v537
    %v539 = vlaneseq
    %v540 = vshrl.u32 %v539, 7
    %v541 = vsub.s32 %v538, %v540
    %v542 = vrot.slane %v535, %v541
    %v544 = vunpack.c.l.s4 1983009808
    %v545 = vunpack.c.0.s8 %v544
    %v546 = vlaneseq
    %v547 = vshrl.u32 %v546, 7
    %v548 = vsub.s32 %v545, %v547
    %v549 = vrot.slane %v533, %v548
    %550 = vrot.lane.b32.xlu0 %v542, 110
    %v551 = vpop.permute.xlu0 %550
    %552 = vrot.lane.b32.xlu0 %v549, 110
    %v553 = vpop.permute.xlu0 %552
    %v554 = vrot.slane %v551, 4
    %v555 = vrot.slane %v553, 4
    %v556 = vsel %vm77, %v554, %v555
    %v557 = vsel %vm140, %v551, %v556
    %560 = vst [vmem:[#allocation2 + $0xc] sm:$0xcc] %v557
    %561 = vst.msk [vmem:[#allocation2 + $0x14] sm:$0xc] %vm84, %v553
    %v562 = vld [vmem:[%s453] sm:$0x3f]
    %v564 = vcombine.high %v562, %v562
    %v566 = vunpack.c.l.s4 1983009808
    %v567 = vunpack.c.0.s8 %v566
    %v568 = vlaneseq
    %v569 = vshrl.u32 %v568, 7
    %v570 = vsub.s32 %v567, %v569
    %v571 = vrot.slane %v562, %v570
    %v573 = vunpack.c.l.s4 1983009808
    %v574 = vunpack.c.0.s8 %v573
    %v575 = vlaneseq
    %v576 = vshrl.u32 %v575, 7
    %v577 = vsub.s32 %v574, %v576
    %v578 = vrot.slane %v564, %v577
    %579 = vrot.lane.b32.xlu0 %v571, 109
    %v580 = vpop.permute.xlu0 %579
    %581 = vrot.lane.b32.xlu0 %v578, 109
    %v582 = vpop.permute.xlu0 %581
    %v583 = vrot.slane %v580, 4
    %v584 = vrot.slane %v582, 4
    %v585 = vsel %vm77, %v583, %v584
    %v586 = vsel %vm170, %v580, %v585
    %589 = vst [vmem:[#allocation2 + $0x18] sm:$0x33] %v586
    %590 = vst.msk [vmem:[#allocation2 + $0x20] sm:$0x3] %vm52, %v582
    %v591 = vld [vmem:[%s453] sm:$0x3f]
    %v593 = vcombine.low %v591, %v591
    %v595 = vunpack.c.l.s4 1983009808
    %v596 = vunpack.c.0.s8 %v595
    %v597 = vlaneseq
    %v598 = vshrl.u32 %v597, 7
    %v599 = vsub.s32 %v596, %v598
    %v600 = vrot.slane %v593, %v599
    %v602 = vunpack.c.l.s4 1983009808
    %v603 = vunpack.c.0.s8 %v602
    %v604 = vlaneseq
    %v605 = vshrl.u32 %v604, 7
    %v606 = vsub.s32 %v603, %v605
    %v607 = vrot.slane %v591, %v606
    %608 = vrot.lane.b32.xlu0 %v600, 108
    %v609 = vpop.permute.xlu0 %608
    %610 = vrot.lane.b32.xlu0 %v607, 108
    %v611 = vpop.permute.xlu0 %610
    %v612 = vrot.slane %v609, 4
    %v613 = vrot.slane %v611, 4
    %v614 = vsel %vm77, %v612, %v613
    %v615 = vsel %vm200, %v609, %v614
    %618 = vst [vmem:[#allocation2 + $0x18] sm:$0xcc] %v615
    %619 = vst.msk [vmem:[#allocation2 + $0x20] sm:$0xc] %vm84, %v611
    %v620 = vld [vmem:[%s453] sm:$0x3f]
    %v622 = vcombine.high %v620, %v620
    %v624 = vunpack.c.l.s4 1983009808
    %v625 = vunpack.c.0.s8 %v624
    %v626 = vlaneseq
    %v627 = vshrl.u32 %v626, 7
    %v628 = vsub.s32 %v625, %v627
    %v629 = vrot.slane %v620, %v628
    %v631 = vunpack.c.l.s4 1983009808
    %v632 = vunpack.c.0.s8 %v631
    %v633 = vlaneseq
    %v634 = vshrl.u32 %v633, 7
    %v635 = vsub.s32 %v632, %v634
    %v636 = vrot.slane %v622, %v635
    %637 = vrot.lane.b32.xlu0 %v629, 92
    %v638 = vpop.permute.xlu0 %637
    %639 = vrot.lane.b32.xlu0 %v636, 92
    %v640 = vpop.permute.xlu0 %639
    %v641 = vrot.slane %v638, 4
    %v642 = vrot.slane %v640, 4
    %v643 = vsel %vm77, %v641, %v642
    %v644 = vsel %vm230, %v638, %v643
    %647 = vst [vmem:[#allocation2 + $0x24] sm:$0x33] %v644
    %648 = vst.msk [vmem:[#allocation2 + $0x2c] sm:$0x3] %vm52, %v640
    %v649 = vld [vmem:[%s453] sm:$0x3f]
    %v651 = vcombine.low %v649, %v649
    %v653 = vunpack.c.l.s4 1983009808
    %v654 = vunpack.c.0.s8 %v653
    %v655 = vlaneseq
    %v656 = vshrl.u32 %v655, 7
    %v657 = vsub.s32 %v654, %v656
    %v658 = vrot.slane %v651, %v657
    %v660 = vunpack.c.l.s4 1983009808
    %v661 = vunpack.c.0.s8 %v660
    %v662 = vlaneseq
    %v663 = vshrl.u32 %v662, 7
    %v664 = vsub.s32 %v661, %v663
    %v665 = vrot.slane %v649, %v664
    %666 = vrot.lane.b32.xlu0 %v658, 91
    %v667 = vpop.permute.xlu0 %666
    %668 = vrot.lane.b32.xlu0 %v665, 91
    %v669 = vpop.permute.xlu0 %668
    %v670 = vrot.slane %v667, 4
    %v671 = vrot.slane %v669, 4
    %v672 = vsel %vm77, %v670, %v671
    %v673 = vsel %vm260, %v667, %v672
    %676 = vst [vmem:[#allocation2 + $0x24] sm:$0xcc] %v673
    %677 = vst.msk [vmem:[#allocation2 + $0x2c] sm:$0xc] %vm84, %v669
    %v678 = vld [vmem:[%s453] sm:$0x3f]
    %v680 = vcombine.high %v678, %v678
    %v682 = vunpack.c.l.s4 1983009808
    %v683 = vunpack.c.0.s8 %v682
    %v684 = vlaneseq
    %v685 = vshrl.u32 %v684, 7
    %v686 = vsub.s32 %v683, %v685
    %v687 = vrot.slane %v678, %v686
    %v689 = vunpack.c.l.s4 1983009808
    %v690 = vunpack.c.0.s8 %v689
    %v691 = vlaneseq
    %v692 = vshrl.u32 %v691, 7
    %v693 = vsub.s32 %v690, %v692
    %v694 = vrot.slane %v680, %v693
    %695 = vrot.lane.b32.xlu0 %v687, 90
    %v696 = vpop.permute.xlu0 %695
    %697 = vrot.lane.b32.xlu0 %v694, 90
    %v698 = vpop.permute.xlu0 %697
    %v699 = vrot.slane %v696, 4
    %v700 = vrot.slane %v698, 4
    %v701 = vsel %vm77, %v699, %v700
    %v702 = vsel %vm290, %v696, %v701
    %705 = vst [vmem:[#allocation2 + $0x30] sm:$0x33] %v702
    %706 = vst.msk [vmem:[#allocation2 + $0x38] sm:$0x3] %vm52, %v698
    %v707 = vld [vmem:[#allocation2] sm:$0xff]
    %v708 = vld [vmem:[#allocation2 + $0x8] sm:$0xf]
    %v709 = vld [vmem:[#allocation2 + $0xc] sm:$0xff]
    %v710 = vld [vmem:[#allocation2 + $0x14] sm:$0xf]
    %v711 = vld [vmem:[#allocation2 + $0x18] sm:$0xff]
    %v712 = vld [vmem:[#allocation2 + $0x20] sm:$0xf]
    %v713 = vld [vmem:[#allocation2 + $0x24] sm:$0xff]
    %v714 = vld [vmem:[#allocation2 + $0x2c] sm:$0xf]
    %v715 = vld [vmem:[#allocation2 + $0x30] sm:$0x33]
    %v716 = vld [vmem:[#allocation2 + $0x38] sm:$0x3]
    %v727 = vunpack.c.l.b16 %v707
    %v728 = vunpack.c.h.b16 %v707
    %v729 = vunpack.c.l.b16 %v708
    %v730 = vunpack.c.l.b16 %v709
    %v731 = vunpack.c.h.b16 %v709
    %v732 = vunpack.c.l.b16 %v710
    %v733 = vunpack.c.l.b16 %v711
    %v734 = vunpack.c.h.b16 %v711
    %v735 = vunpack.c.l.b16 %v712
    %v736 = vunpack.c.l.b16 %v713
    %v737 = vunpack.c.h.b16 %v713
    %v738 = vunpack.c.l.b16 %v714
    %v739 = vunpack.c.l.b16 %v715
    %v740 = vunpack.c.h.b16 %v715
    %v741 = vunpack.c.l.b16 %v716
    %v742 = vpack.c.b16 %v730, %v727
    %v743 = vpack.c.b16 %v731, %v728
    %v744 = vpack.c.b16 %v732, %v729
    %v745 = vpack.c.b16 %v736, %v733
    %v746 = vpack.c.b16 %v737, %v734
    %v747 = vpack.c.b16 %v738, %v735
    %v748 = vpack.c.b16 %v739, %v739
    %v749 = vpack.c.b16 %v740, %v740
    %v750 = vpack.c.b16 %v741, %v741
    %v758 = vsel %vm355, %v748, 0
    %v761 = vsel %vm355, %v749, 0
    %v764 = vsel %vm355, %v750, 0
    %766 = vmatprep.subr.bf16.mxu0 %v743
    %767 = vmatpush1.bf16.msra.mxu0 %v742
    %768 = vmatprep.subr.bf16.mxu0 %v746
    %769 = vmatpush1.bf16.msra.mxu0 %v745
    %770 = vmatprep.subr.bf16.mxu0 %v761
    %771 = vmatpush1.bf16.msra.mxu0 %v758
    %772 = vmatprep.subr.bf16.mxu0 0
    %773 = vmatpush1.bf16.msra.mxu0 0
    %774 = vmatprep.subr.bf16.mxu0 0
    %775 = vmatpush1.bf16.msra.mxu0 0
    %776 = vmatprep.subr.bf16.mxu0 0
    %777 = vmatpush1.bf16.msra.mxu0 0
    %778 = vmatprep.subr.bf16.mxu0 0
    %779 = vmatpush1.bf16.msra.mxu0 0
    %780 = vmatprep.subr.bf16.mxu0 0
    %781 = vmatpush1.bf16.msra.mxu0 0
    %782 = vmatprep.subr.bf16.mxu0 0
    %783 = vmatpush1.bf16.msra.mxu0 0
    %784 = vmatprep.subr.bf16.mxu0 0
    %785 = vmatpush1.bf16.msra.mxu0 0
    %786 = vmatprep.subr.bf16.mxu0 0
    %787 = vmatpush1.bf16.msra.mxu0 0
    %788 = vmatprep.subr.bf16.mxu0 0
    %789 = vmatpush1.bf16.msra.mxu0 0
    %790 = vmatprep.subr.bf16.mxu0 0
    %791 = vmatpush1.bf16.msra.mxu0 0
    %792 = vmatprep.subr.bf16.mxu0 0
    %793 = vmatpush1.bf16.msra.mxu0 0
    %794 = vmatprep.subr.bf16.mxu0 0
    %795 = vmatpush1.bf16.msra.mxu0 0
    %796 = vmatprep.subr.bf16.mxu0 0
    %797 = vmatpush1.bf16.msra.mxu0 0
    %798 = vmatprep.mubr.bf16.mxu0 0
    %799 = vmatmul.mubr.bf16.gmra.mrb[0].mxu0 %v353
    %v800 = vpop.f32.mrb[0].mxu0
    %v801 = vadd.f32 %v309, %v800
    %v802 = vpop.f32.mrb[0].mxu0
    %v803 = vadd.f32 %v309, %v802
    %v804 = vpop.f32.mrb[0].mxu0
    %v805 = vpop.f32.mrb[0].mxu0
    %806 = vdwg.mxu0
    %807 = vmatprep.subr.bf16.mxu0 0
    %808 = vmatpush1.bf16.msra.mxu0 %v744
    %809 = vmatprep.subr.bf16.mxu0 0
    %810 = vmatpush1.bf16.msra.mxu0 %v747
    %811 = vmatprep.subr.bf16.mxu0 0
    %812 = vmatpush1.bf16.msra.mxu0 %v764
    %813 = vmatprep.subr.bf16.mxu0 0
    %814 = vmatpush1.bf16.msra.mxu0 0
    %815 = vmatprep.subr.bf16.mxu0 0
    %816 = vmatpush1.bf16.msra.mxu0 0
    %817 = vmatprep.subr.bf16.mxu0 0
    %818 = vmatpush1.bf16.msra.mxu0 0
    %819 = vmatprep.subr.bf16.mxu0 0
    %820 = vmatpush1.bf16.msra.mxu0 0
    %821 = vmatprep.subr.bf16.mxu0 0
    %822 = vmatpush1.bf16.msra.mxu0 0
    %823 = vmatprep.subr.bf16.mxu0 0
    %824 = vmatpush1.bf16.msra.mxu0 0
    %825 = vmatprep.subr.bf16.mxu0 0
    %826 = vmatpush1.bf16.msra.mxu0 0
    %827 = vmatprep.subr.bf16.mxu0 0
    %828 = vmatpush1.bf16.msra.mxu0 0
    %829 = vmatprep.subr.bf16.mxu0 0
    %830 = vmatpush1.bf16.msra.mxu0 0
    %831 = vmatprep.subr.bf16.mxu0 0
    %832 = vmatpush1.bf16.msra.mxu0 0
    %833 = vmatprep.subr.bf16.mxu0 0
    %834 = vmatpush1.bf16.msra.mxu0 0
    %835 = vmatprep.subr.bf16.mxu0 0
    %836 = vmatpush1.bf16.msra.mxu0 0
    %837 = vmatprep.subr.bf16.mxu0 0
    %838 = vmatpush1.bf16.msra.mxu0 0
    %839 = vmatprep.mubr.bf16.mxu0 0
    %840 = vmatmul.mubr.bf16.gmra.mrb[0].mxu0 %v353
    %v841 = vpop.f32.mrb[0].mxu0
    %v842 = vadd.f32 %v309, %v841
    %v843 = vpop.f32.mrb[0].mxu0
    %v844 = vpop.f32.mrb[0].mxu0
    %v845 = vpop.f32.mrb[0].mxu0
    %846 = vdwg.mxu0
    %v847 = vmax.f32 %v801, 0.0
    %v848 = vmax.f32 %v803, 0.0
    %v849 = vmax.f32 %v842, 0.0
    %s850 = scalar_lea.vmem [#allocation6], 24
    %851 = vst [vmem:[%s850] sm:$0xff] %v847
    %852 = vst [vmem:[%s850 + $0x8] sm:$0xff] %v848
    %853 = vst.msk [vmem:[%s850 + $0x10] sm:$0xff] %vm451, %v849
    // Predicated region
    $region18: #{tpu_custom_call.1} parent=1 // pred_check
      _
    $region19: #{tpu_custom_call.1} parent=1 // pred_check_branch
      %855 = sbr.rel (0) target = $region21
    $region20: #{tpu_custom_call.1} parent=1 // pred_region
      %s857 = ssub.s32 768, 768
      %858 = vsyncadd [#allocation5], %s857
      %s859 = sshll.u32 [#allocation6], 4
      %s860 = int_to_ptr.vmem [resolvable:$true] %s859
      %865 = dma.vmem_to_hbm [thread:$0]  %s860, 768, %s3, [#allocation5], 384, 384, 24
    $region21: #{tpu_custom_call.1} parent=1 // pred_fallthru
      _
    // Predicated region
    $region22: #{tpu_custom_call.1} parent=1 // pred_check
      _
    $region23: #{tpu_custom_call.1} parent=1 // pred_check_branch
      %867 = sbr.rel (0) target = $region25
    $region24: #{tpu_custom_call.1} parent=1 // pred_region
      %868 = dma.done [#allocation5], 768
    $region25: #{tpu_custom_call.1} parent=1 // pred_fallthru
      _
    %869 = vsyncpa [#allocation4], 1
    %870 = vsyncpa [#allocation5], 1

</llo_original>
